<compile_context>
chip_gen: v5e
topology: v5e:2x2
jax: 0.10.0
libtpu: 0.0.40
codegen_flags: <defaults>
</compile_context>

<pallas_src>
import functools

import numpy as np
import jax
import jax.numpy as jnp
from jax.experimental import pallas as pl
from jax.experimental.pallas import tpu as pltpu


# --------------------------------------------------------------------------- kernels
def _transition_pool_kernel(x_ref, w_ref, scale_ref, shift_ref, o_ref, *, pairs, wo):
    """Fused 1x1 conv + BN(scale,shift) + ReLU + 2x2 avg-pool for one tile.

    x_ref     : (pairs, 2, 2, wo, C)   (row-pair, h-in-pair, w-parity, Wo, C)
    w_ref     : (C, C)                 raw conv weight, (C_in, C_out) layout
    scale_ref : (1, C) f32             gamma / sqrt(var + eps)
    shift_ref : (1, C) f32             (bias - mean) * scale + beta
    o_ref     : (pairs, wo, C)
    """
    c = x_ref.shape[-1]
    # Single large matmul over the whole tile (full MXU rows, no unroll).
    x = x_ref[...].reshape(pairs * 4 * wo, c)
    y = jnp.dot(x, w_ref[...], preferred_element_type=jnp.float32)
    y = jnp.maximum(y * scale_ref[...] + shift_ref[...], 0.0)   # BN affine + ReLU (f32, VPU)
    # 2x2 average pool = three leading-dim (sublane-aligned) VPU adds + one scale.
    y = y.reshape(pairs, 2, 2, wo, c)
    o = 0.25 * (y[:, 0, 0] + y[:, 0, 1] + y[:, 1, 0] + y[:, 1, 1])
    o_ref[...] = o.astype(o_ref.dtype)


def _transition_nopool_kernel(x_ref, w_ref, scale_ref, shift_ref, o_ref):
    """Fused 1x1 conv + BN(scale,shift) + ReLU.  x_ref/o_ref: (T, C)."""
    y = jnp.dot(x_ref[...], w_ref[...], preferred_element_type=jnp.float32)
    o_ref[...] = jnp.maximum(y * scale_ref[...] + shift_ref[...], 0.0).astype(o_ref.dtype)


# --------------------------------------------------------------------------- helpers
def _vmem_capacity_bytes():
    """Per-core VMEM capacity; conservative (v7x) fallback if the query fails."""
    try:
        return int(pltpu.get_tpu_info().vmem_capacity_bytes)
    except Exception:
        return 64 * 1024 * 1024


def _pick_tile(total, unit_bytes, budget_bytes, *, align=1, min_steps=2):
    """Largest tile (in rows of `unit_bytes`) that fits the VMEM budget, while
    keeping >= min_steps grid steps (so both v7x TensorCores get work) and an
    `align`-row multiple (sublane pack for the flat path)."""
    pt = max(1, budget_bytes // max(unit_bytes, 1))
    if total > 1:
        pt = min(pt, -(-total // min_steps))          # ceil(total / min_steps)
    pt = min(pt, total)
    if pt > align:
        pt -= pt % align
    return max(pt, 1)


def _compiler_params(needed_bytes, cap):
    # Only raise the scoped-VMEM limit when the per-generation default would be tight.
    vmem_limit = None
    if needed_bytes > 12 * 1024 * 1024:
        vmem_limit = int(min(cap, needed_bytes + 8 * 1024 * 1024))
    return pltpu.CompilerParams(dimension_semantics=("parallel",),
                                vmem_limit_bytes=vmem_limit)


# --------------------------------------------------------------------------- wrapper
def transition_layer(x, conv_w, conv_b, gamma, beta, run_mean, run_var,
                     eps=1e-5, use_pool=True, compute_dtype=jnp.float32,
                     data_format="NCHW"):
    """PeleeNet Transition_layer forward (eval-mode BatchNorm).

    x: (N, C, H, W) for data_format="NCHW" (PyTorch layout) or (N, H, W, C) for
    "NHWC" (no wrapper transposes on the no-pool path)."""
    assert data_format in ("NCHW", "NHWC")
    if data_format == "NCHW":
        N, C, H, W = x.shape
    else:
        N, H, W, C = x.shape
    out_dtype = x.dtype
    itemsize = jnp.dtype(compute_dtype).itemsize
    out_itemsize = jnp.dtype(out_dtype).itemsize

    cap = _vmem_capacity_bytes()
    budget = int(cap * 0.55)      # budget for the double-buffered x + out tiles

    # Per-channel f32 BN affine, applied after the matmul (bf16-safe weights).
    scale = gamma / jnp.sqrt(run_var + eps)
    shift = (conv_b - run_mean) * scale + beta
    scale = scale.astype(jnp.float32).reshape(1, C)
    shift = shift.astype(jnp.float32).reshape(1, C)
    w = conv_w.reshape(C, C).T.astype(compute_dtype)          # (C_in, C_out), raw weight

    # Tiny constant blocks (w/scale/shift); for very large C on v7x one could mark
    # them pipeline_mode=pl.Buffered(1) to skip double-buffering them.
    const_bytes = 2 * (C * C * itemsize + 2 * C * 4)

    if use_pool:
        assert H % 2 == 0 and W % 2 == 0, "2x2 avg-pool needs even H and W"
        Ho, Wo = H // 2, W // 2

        # One wrapper-side layout change (same cost class as the NCHW->NHWC
        # transpose this layer needed anyway): (row-pair, h-in-pair, w-parity, Wo, C).
        if data_format == "NCHW":
            xp = x.reshape(N, C, Ho, 2, Wo, 2).transpose(0, 2, 3, 5, 4, 1)
        else:
            xp = x.reshape(N, Ho, 2, Wo, 2, C).transpose(0, 1, 2, 4, 3, 5)
        xp = xp.reshape(N * Ho, 2, 2, Wo, C).astype(compute_dtype)

        total = N * Ho
        unit = 4 * Wo * C * itemsize + Wo * C * out_itemsize   # one pair-row: x + out
        pt = _pick_tile(total, 2 * unit, budget)                # 2x: double buffering
        grid = (pl.cdiv(total, pt),)
        needed = 2 * unit * pt + const_bytes

        kernel = functools.partial(_transition_pool_kernel, pairs=pt, wo=Wo)
        out = pl.pallas_call(
            kernel,
            out_shape=jax.ShapeDtypeStruct((total, Wo, C), out_dtype),
            grid=grid,
            in_specs=[
                pl.BlockSpec((pt, 2, 2, Wo, C), lambda i: (i, 0, 0, 0, 0)),  # x tiles
                pl.BlockSpec((C, C), lambda i: (0, 0)),                      # conv weight
                pl.BlockSpec((1, C), lambda i: (0, 0)),                      # BN scale
                pl.BlockSpec((1, C), lambda i: (0, 0)),                      # BN shift
            ],
            out_specs=pl.BlockSpec((pt, Wo, C), lambda i: (i, 0, 0)),
            compiler_params=_compiler_params(needed, cap),
        )(xp, w, scale, shift)

        out = out.reshape(N, Ho, Wo, C)
        return out.transpose(0, 3, 1, 2) if data_format == "NCHW" else out

    # ---- no pooling: fused 1x1 conv + BN + ReLU on a flat (rows, C) layout ----
    if data_format == "NCHW":
        x_rows = x.transpose(0, 2, 3, 1).reshape(N * H * W, C)
    else:
        x_rows = x.reshape(N * H * W, C)                       # free: no transpose
    x_rows = x_rows.astype(compute_dtype)

    total = N * H * W
    sub = 16 if itemsize < 4 else 8                            # sublane pack
    unit = C * itemsize + C * out_itemsize
    t = _pick_tile(total, 2 * unit, budget, align=sub)
    grid = (pl.cdiv(total, t),)
    needed = 2 * unit * t + const_bytes

    out = pl.pallas_call(
        _transition_nopool_kernel,
        out_shape=jax.ShapeDtypeStruct((total, C), out_dtype),
        grid=grid,
        in_specs=[
            pl.BlockSpec((t, C), lambda i: (i, 0)),
            pl.BlockSpec((C, C), lambda i: (0, 0)),
            pl.BlockSpec((1, C), lambda i: (0, 0)),
            pl.BlockSpec((1, C), lambda i: (0, 0)),
        ],
        out_specs=pl.BlockSpec((t, C), lambda i: (i, 0)),
        compiler_params=_compiler_params(needed, cap),
    )(x_rows, w, scale, shift)

    out = out.reshape(N, H, W, C)
    return out.transpose(0, 3, 1, 2) if data_format == "NCHW" else out


# --------------------------------------------------------------------------- reference
def _reference(x_nchw, conv_w, conv_b, gamma, beta, run_mean, run_var,
               eps=1e-5, use_pool=True):
    """Pure-JAX reference matching PyTorch (eval-mode BN) semantics."""
    N, C, H, W = x_nchw.shape
    w2d = conv_w.reshape(C, C)                                  # (C_out, C_in)
    y = jnp.einsum('nchw,oc->nohw', x_nchw, w2d) + conv_b[None, :, None, None]
    y = (y - run_mean[None, :, None, None]) / jnp.sqrt(run_var[None, :, None, None] + eps)
    y = y * gamma[None, :, None, None] + beta[None, :, None, None]
    y = jnp.maximum(y, 0.0)
    if use_pool:
        y = y.reshape(N, C, H // 2, 2, W // 2, 2).mean(axis=(3, 5))
    return y


# --------------------------------------------------------------------------- test
if __name__ == "__main__":
    N, C, H, W = 2, 4, 16, 16
    key = jax.random.PRNGKey(0)
    kx, kw, kb, kx2 = jax.random.split(key, 4)

    x = jax.random.normal(kx, (N, C, H, W), dtype=jnp.float32)

    # Deterministic synthetic parameters (shapes from nn.Conv2d / nn.BatchNorm2d).
    conv_w = jax.random.normal(kw, (C, C, 1, 1), dtype=jnp.float32) * 0.5
    conv_b = jax.random.normal(kb, (C,), dtype=jnp.float32) * 0.1
    gamma = 1.0 + 0.1 * jnp.arange(C, dtype=jnp.float32)
    beta = 0.05 * jnp.arange(C, dtype=jnp.float32)
    run_mean = 0.01 * jnp.arange(C, dtype=jnp.float32)
    run_var = 1.0 + 0.02 * jnp.arange(C, dtype=jnp.float32)

    ref_pool = _reference(x, conv_w, conv_b, gamma, beta, run_mean, run_var, use_pool=True)
    ref_nopool = _reference(x, conv_w, conv_b, gamma, beta, run_mean, run_var, use_pool=False)

    # f32 compute path, with pooling (NCHW, matching the PyTorch module).
    out = transition_layer(x, conv_w, conv_b, gamma, beta, run_mean, run_var,
                           use_pool=True, compute_dtype=jnp.float32)
    out = jax.block_until_ready(out)
    assert out.shape == (N, C, H // 2, W // 2), out.shape
    np.testing.assert_allclose(np.asarray(out), np.asarray(ref_pool), rtol=1e-5, atol=1e-5)

    # bf16 MXU fast path (BN scale/shift, ReLU, pooling stay f32), looser tolerance.
    out_bf16 = transition_layer(x, conv_w, conv_b, gamma, beta, run_mean, run_var,
                                use_pool=True, compute_dtype=jnp.bfloat16)
    out_bf16 = jax.block_until_ready(out_bf16)
    np.testing.assert_allclose(np.asarray(out_bf16), np.asarray(ref_pool),
                               rtol=2e-2, atol=2e-2)

    # f32 compute path, no pooling.
    out_np = transition_layer(x, conv_w, conv_b, gamma, beta, run_mean, run_var,
                              use_pool=False, compute_dtype=jnp.float32)
    out_np = jax.block_until_ready(out_np)
    assert out_np.shape == (N, C, H, W), out_np.shape
    np.testing.assert_allclose(np.asarray(out_np), np.asarray(ref_nopool),
                               rtol=1e-5, atol=1e-5)

    # NHWC end-to-end path (no NCHW<->NHWC HBM round trips), with pooling.
    out_nhwc = transition_layer(jnp.transpose(x, (0, 2, 3, 1)), conv_w, conv_b, gamma,
                                beta, run_mean, run_var, use_pool=True,
                                compute_dtype=jnp.float32, data_format="NHWC")
    out_nhwc = jax.block_until_ready(out_nhwc)
    np.testing.assert_allclose(np.asarray(out_nhwc),
                               np.asarray(jnp.transpose(ref_pool, (0, 2, 3, 1))),
                               rtol=1e-5, atol=1e-5)

    # Ragged grid (total row-pairs not divisible by the tile) -> pl.cdiv + masked edge.
    x2 = jax.random.normal(kx2, (1, C, 10, 16), dtype=jnp.float32)
    ref2 = _reference(x2, conv_w, conv_b, gamma, beta, run_mean, run_var, use_pool=True)
    out2 = transition_layer(x2, conv_w, conv_b, gamma, beta, run_mean, run_var,
                            use_pool=True, compute_dtype=jnp.float32)
    out2 = jax.block_until_ready(out2)
    np.testing.assert_allclose(np.asarray(out2), np.asarray(ref2), rtol=1e-5, atol=1e-5)

    print("KERNEL_OK")
</pallas_src>

<mosaic_0001>
module attributes {stable_mosaic.version = 11 : i64} {
  func.func @_transition_pool_kernel(%arg0: i32, %arg1: memref<8x2x2x8x4xf32, #tpu.memory_space<vmem>>, %arg2: memref<4x4xf32, #tpu.memory_space<vmem>>, %arg3: memref<1x4xf32, #tpu.memory_space<vmem>>, %arg4: memref<1x4xf32, #tpu.memory_space<vmem>>, %arg5: memref<8x8x4xf32, #tpu.memory_space<vmem>>) attributes {dimension_semantics = [#tpu.dimension_semantics<parallel>], iteration_bounds = array<i64: 2>, scalar_prefetch = 0 : i64, scratch_operands = 0 : i64, tpu.core_type = #tpu.core_type<tc>, window_params = [{transform_indices = @transform_0, window_bounds = array<i64: 8, 2, 2, 8, 4>}, {pipeline_mode = #tpu.pipeline_mode<synchronous>, transform_indices = @transform_1, window_bounds = array<i64: 4, 4>}, {pipeline_mode = #tpu.pipeline_mode<synchronous>, transform_indices = @transform_2, window_bounds = array<i64: 1, 4>}, {pipeline_mode = #tpu.pipeline_mode<synchronous>, transform_indices = @transform_3, window_bounds = array<i64: 1, 4>}, {transform_indices = @transform_4, window_bounds = array<i64: 8, 8, 4>}]} {
    %c0 = arith.constant 0 : index
    %c0_0 = arith.constant 0 : index
    %c0_1 = arith.constant 0 : index
    %c0_2 = arith.constant 0 : index
    %c0_3 = arith.constant 0 : index
    %0 = vector.load %arg1[%c0, %c0_0, %c0_1, %c0_2, %c0_3] : memref<8x2x2x8x4xf32, #tpu.memory_space<vmem>>, vector<8x2x2x8x4xf32>
    %1 = vector.shape_cast %0 : vector<8x2x2x8x4xf32> to vector<256x4xf32>
    %c0_4 = arith.constant 0 : index
    %c0_5 = arith.constant 0 : index
    %2 = vector.load %arg2[%c0_4, %c0_5] : memref<4x4xf32, #tpu.memory_space<vmem>>, vector<4x4xf32>
    %cst = arith.constant dense<0.000000e+00> : vector<256x4xf32>
    %3 = tpu.matmul %1, %2, %cst {dimension_numbers = #tpu.dot_dimension_numbers<[1], [0], [0], [1], [0, 0, 1, 1], [], []>} : vector<256x4xf32>, vector<4x4xf32>, vector<256x4xf32> -> vector<256x4xf32>
    %c0_6 = arith.constant 0 : index
    %c0_7 = arith.constant 0 : index
    %4 = vector.load %arg3[%c0_6, %c0_7] : memref<1x4xf32, #tpu.memory_space<vmem>>, vector<1x4xf32>
    %5 = vector.broadcast %4 : vector<1x4xf32> to vector<256x4xf32>
    %6 = arith.mulf %3, %5 : vector<256x4xf32>
    %c0_8 = arith.constant 0 : index
    %c0_9 = arith.constant 0 : index
    %7 = vector.load %arg4[%c0_8, %c0_9] : memref<1x4xf32, #tpu.memory_space<vmem>>, vector<1x4xf32>
    %8 = vector.broadcast %7 : vector<1x4xf32> to vector<256x4xf32>
    %9 = arith.addf %6, %8 : vector<256x4xf32>
    %cst_10 = arith.constant 0.000000e+00 : f32
    %10 = vector.broadcast %cst_10 : f32 to vector<256x4xf32>
    %11 = arith.maximumf %9, %10 : vector<256x4xf32>
    %12 = vector.shape_cast %11 : vector<256x4xf32> to vector<8x2x2x8x4xf32>
    %13 = vector.extract_strided_slice %12 {offsets = [0, 0, 0, 0, 0], sizes = [8, 1, 1, 8, 4], strides = [1, 1, 1, 1, 1]} : vector<8x2x2x8x4xf32> to vector<8x1x1x8x4xf32>
    %14 = vector.shape_cast %13 : vector<8x1x1x8x4xf32> to vector<8x8x4xf32>
    %15 = vector.extract_strided_slice %12 {offsets = [0, 0, 1, 0, 0], sizes = [8, 1, 1, 8, 4], strides = [1, 1, 1, 1, 1]} : vector<8x2x2x8x4xf32> to vector<8x1x1x8x4xf32>
    %16 = vector.shape_cast %15 : vector<8x1x1x8x4xf32> to vector<8x8x4xf32>
    %17 = arith.addf %14, %16 : vector<8x8x4xf32>
    %18 = vector.extract_strided_slice %12 {offsets = [0, 1, 0, 0, 0], sizes = [8, 1, 1, 8, 4], strides = [1, 1, 1, 1, 1]} : vector<8x2x2x8x4xf32> to vector<8x1x1x8x4xf32>
    %19 = vector.shape_cast %18 : vector<8x1x1x8x4xf32> to vector<8x8x4xf32>
    %20 = arith.addf %17, %19 : vector<8x8x4xf32>
    %21 = vector.extract_strided_slice %12 {offsets = [0, 1, 1, 0, 0], sizes = [8, 1, 1, 8, 4], strides = [1, 1, 1, 1, 1]} : vector<8x2x2x8x4xf32> to vector<8x1x1x8x4xf32>
    %22 = vector.shape_cast %21 : vector<8x1x1x8x4xf32> to vector<8x8x4xf32>
    %23 = arith.addf %20, %22 : vector<8x8x4xf32>
    %cst_11 = arith.constant 2.500000e-01 : f32
    %24 = vector.broadcast %cst_11 : f32 to vector<8x8x4xf32>
    %25 = arith.mulf %24, %23 : vector<8x8x4xf32>
    %c0_12 = arith.constant 0 : index
    %c0_13 = arith.constant 0 : index
    %c0_14 = arith.constant 0 : index
    %26 = vector.load %arg5[%c0_12, %c0_13, %c0_14] : memref<8x8x4xf32, #tpu.memory_space<vmem>>, vector<8x8x4xf32>
    tpu.vector_store %arg5[%c0_12, %c0_13, %c0_14], %25 {strides = array<i32>} : memref<8x8x4xf32, #tpu.memory_space<vmem>>, vector<8x8x4xf32>,
    return
  }
  func.func @transform_0(%arg0: i32) -> (i32, i32, i32, i32, i32) {
    %c0_i32 = arith.constant 0 : i32
    %c0_i32_0 = arith.constant 0 : i32
    %c0_i32_1 = arith.constant 0 : i32
    %c0_i32_2 = arith.constant 0 : i32
    %c0_i32_3 = arith.constant 0 : i32
    return %arg0, %c0_i32, %c0_i32_0, %c0_i32_1, %c0_i32_2 : i32, i32, i32, i32, i32
  }
  func.func @transform_1(%arg0: i32) -> (i32, i32) {
    %c0_i32 = arith.constant 0 : i32
    %c0_i32_0 = arith.constant 0 : i32
    %c0_i32_1 = arith.constant 0 : i32
    return %c0_i32, %c0_i32_0 : i32, i32
  }
  func.func @transform_2(%arg0: i32) -> (i32, i32) {
    %c0_i32 = arith.constant 0 : i32
    %c0_i32_0 = arith.constant 0 : i32
    %c0_i32_1 = arith.constant 0 : i32
    return %c0_i32, %c0_i32_0 : i32, i32
  }
  func.func @transform_3(%arg0: i32) -> (i32, i32) {
    %c0_i32 = arith.constant 0 : i32
    %c0_i32_0 = arith.constant 0 : i32
    %c0_i32_1 = arith.constant 0 : i32
    return %c0_i32, %c0_i32_0 : i32, i32
  }
  func.func @transform_4(%arg0: i32) -> (i32, i32, i32) {
    %c0_i32 = arith.constant 0 : i32
    %c0_i32_0 = arith.constant 0 : i32
    %c0_i32_1 = arith.constant 0 : i32
    return %arg0, %c0_i32, %c0_i32_0 : i32, i32, i32
  }
}

</mosaic_0001>

<llo_original>
// kernel: tpu_custom_call.1
$region0: #{tpu_custom_call.1}
  #allocation0 [shape = 'u32[]', space=smem, size = 0x4, offset = 0x4, fixed_abs, tag = 'smem constant byte address 0x4 - core index']
  #allocation1 [shape = 'u32[72,128]{1,0:T(1,128)}', space=vmem, size = 0x9000, scoped, tag = 'internal scratch']
  %s0 = inlined_call_operand.vmem [shape: f32[16,2,2,8,4], index: 0, kind: input, shape index: {}]
  %s1 = inlined_call_operand.vmem [shape: f32[4,4], index: 1, kind: input, shape index: {}]
  %s2 = inlined_call_operand.vmem [shape: f32[1,4], index: 2, kind: input, shape index: {}]
  %s3 = inlined_call_operand.vmem [shape: f32[1,4], index: 3, kind: input, shape index: {}]
  %s4 = inlined_call_operand.vmem [shape: f32[16,8,4], index: 4, kind: output, shape index: {}]
  %s5 = sld [smem:[#allocation0]]
  $region49: #{tpu_custom_call.1} parent=0
    _
  %s7 = ssub.s32 1, %s5
  %s8 = scalar_select 0, %s7, %s5
  loop: start=0, step=1, limit=4
  $region2: #{tpu_custom_call.1} parent=0 // loop_pre_header
    _
  $region3: #{tpu_custom_call.1} parent=0 // loop_header
    %s10 = sphi 0, %s14
    %p11 = scmp.ge.s32.totalorder %s10, 4
    %s20 = sphi 0, %s22
    %s23 = sphi 0, %s20
    %s24 = sphi 0, %s23
    %s40 = sphi 0, %s24
    %s44 = sphi 0, %s44
    %s46 = sphi 0, %s44
    %s47 = sphi 0, %s46
    %s61 = sphi 0, %s47
    %s65 = sphi 0, %s65
    %s67 = sphi 0, %s65
    %s68 = sphi 0, %s67
    %s82 = sphi 0, %s68
    %s86 = sphi 0, %s86
    %s88 = sphi 0, %s86
    %s89 = sphi 0, %s88
    %s103 = sphi 0, %s89
    %s109 = sphi 0, %s111
    %s112 = sphi 0, %s109
    %s113 = sphi 0, %s112
    %s129 = sphi 0, %s113
  $region4: #{tpu_custom_call.1} parent=0 // loop_header_branch
    %13 = sbr.rel (%p11) target = $region8
  $region5: #{tpu_custom_call.1} parent=0 // loop_body
    %s15 = ssub.s32 %s10, 1
    %s16 = ssub.s32 %s10, 2
    %s17 = sadd.s32 %s10, 1
    %s18 = ssub.s32 %s10, %s17
    %p19 = scmp.eq.s32.totalorder %s18, 0
    %s21 = sadd.s32 %s20, 1
    %s22 = scalar_select %p19, %s20, %s21
    %p25 = pneg %p19
    %p26 = scmp.eq.s32.totalorder %s10, 1
    %p27 = por %p25, %p26
    %p28 = scmp.ne.s32.totalorder %s20, %s23
    %p29 = scmp.eq.s32.totalorder %s10, 0
    %p30 = por %p28, %p29
    %p31 = scmp.ne.s32.totalorder %s20, %s23
    %p32 = scmp.eq.s32.totalorder %s15, 1
    %p33 = por %p31, %p32
    %p34 = scmp.ne.s32.totalorder %s23, %s24
    %p35 = scmp.eq.s32.totalorder %s15, 0
    %p36 = por %p34, %p35
    %p37 = scmp.ne.s32.totalorder %s23, %s24
    %p38 = scmp.eq.s32.totalorder %s16, 1
    %p39 = por %p37, %p38
    %p41 = scmp.ne.s32.totalorder %s24, %s40
    %p42 = scmp.eq.s32.totalorder %s16, 0
    %p43 = por %p41, %p42
    %s45 = sadd.s32 %s44, 1
    %p48 = scmp.eq.s32.totalorder %s10, 1
    %p49 = scmp.ne.s32.totalorder %s44, %s46
    %p50 = scmp.eq.s32.totalorder %s10, 0
    %p51 = por %p49, %p50
    %p52 = scmp.ne.s32.totalorder %s44, %s46
    %p53 = scmp.eq.s32.totalorder %s15, 1
    %p54 = por %p52, %p53
    %p55 = scmp.ne.s32.totalorder %s46, %s47
    %p56 = scmp.eq.s32.totalorder %s15, 0
    %p57 = por %p55, %p56
    %p58 = scmp.ne.s32.totalorder %s46, %s47
    %p59 = scmp.eq.s32.totalorder %s16, 1
    %p60 = por %p58, %p59
    %p62 = scmp.ne.s32.totalorder %s47, %s61
    %p63 = scmp.eq.s32.totalorder %s16, 0
    %p64 = por %p62, %p63
    %s66 = sadd.s32 %s65, 1
    %p69 = scmp.eq.s32.totalorder %s10, 1
    %p70 = scmp.ne.s32.totalorder %s65, %s67
    %p71 = scmp.eq.s32.totalorder %s10, 0
    %p72 = por %p70, %p71
    %p73 = scmp.ne.s32.totalorder %s65, %s67
    %p74 = scmp.eq.s32.totalorder %s15, 1
    %p75 = por %p73, %p74
    %p76 = scmp.ne.s32.totalorder %s67, %s68
    %p77 = scmp.eq.s32.totalorder %s15, 0
    %p78 = por %p76, %p77
    %p79 = scmp.ne.s32.totalorder %s67, %s68
    %p80 = scmp.eq.s32.totalorder %s16, 1
    %p81 = por %p79, %p80
    %p83 = scmp.ne.s32.totalorder %s68, %s82
    %p84 = scmp.eq.s32.totalorder %s16, 0
    %p85 = por %p83, %p84
    %s87 = sadd.s32 %s86, 1
    %p90 = scmp.eq.s32.totalorder %s10, 1
    %p91 = scmp.ne.s32.totalorder %s86, %s88
    %p92 = scmp.eq.s32.totalorder %s10, 0
    %p93 = por %p91, %p92
    %p94 = scmp.ne.s32.totalorder %s86, %s88
    %p95 = scmp.eq.s32.totalorder %s15, 1
    %p96 = por %p94, %p95
    %p97 = scmp.ne.s32.totalorder %s88, %s89
    %p98 = scmp.eq.s32.totalorder %s15, 0
    %p99 = por %p97, %p98
    %p100 = scmp.ne.s32.totalorder %s88, %s89
    %p101 = scmp.eq.s32.totalorder %s16, 1
    %p102 = por %p100, %p101
    %p104 = scmp.ne.s32.totalorder %s89, %s103
    %p105 = scmp.eq.s32.totalorder %s16, 0
    %p106 = por %p104, %p105
    %s107 = ssub.s32 %s10, %s17
    %p108 = scmp.eq.s32.totalorder %s107, 0
    %s110 = sadd.s32 %s109, 1
    %s111 = scalar_select %p108, %s109, %s110
    %p114 = pneg %p108
    %p115 = scmp.eq.s32.totalorder %s10, 1
    %p116 = por %p114, %p115
    %p117 = scmp.ne.s32.totalorder %s109, %s112
    %p118 = scmp.eq.s32.totalorder %s10, 0
    %p119 = por %p117, %p118
    %p120 = scmp.ne.s32.totalorder %s109, %s112
    %p121 = scmp.eq.s32.totalorder %s15, 1
    %p122 = por %p120, %p121
    %p123 = scmp.ne.s32.totalorder %s112, %s113
    %p124 = scmp.eq.s32.totalorder %s15, 0
    %p125 = por %p123, %p124
    %p126 = scmp.ne.s32.totalorder %s112, %s113
    %p127 = scmp.eq.s32.totalorder %s16, 1
    %p128 = por %p126, %p127
    %p130 = scmp.ne.s32.totalorder %s113, %s129
    %p131 = scmp.eq.s32.totalorder %s16, 0
    %p132 = por %p130, %p131
    %p133 = scmp.le.s32.totalorder 1, %s10
    %p134 = scmp.lt.s32.totalorder %s10, 3
    %p135 = pnand %p133, %p134
    %p136 = pneg %p135
    // Predicated region
    $region9: #{tpu_custom_call.1} parent=5 // pred_check
      _
    $region10: #{tpu_custom_call.1} parent=5 // pred_check_branch
      %138 = sbr.rel (%p135) target = $region12
    $region11: #{tpu_custom_call.1} parent=5 // pred_region
      %s139 = ssub.s32 %s10, 1
      // Predicated region
      $region13: #{tpu_custom_call.1} parent=11 // pred_check
        %p140 = pneg %p57
      $region14: #{tpu_custom_call.1} parent=11 // pred_check_branch
        %142 = sbr.rel (%p140) target = $region16
      $region15: #{tpu_custom_call.1} parent=11 // pred_region
        _
      $region16: #{tpu_custom_call.1} parent=11 // pred_fallthru
        _
      // Predicated region
      $region17: #{tpu_custom_call.1} parent=11 // pred_check
        %p143 = pneg %p78
      $region18: #{tpu_custom_call.1} parent=11 // pred_check_branch
        %145 = sbr.rel (%p143) target = $region20
      $region19: #{tpu_custom_call.1} parent=11 // pred_region
        _
      $region20: #{tpu_custom_call.1} parent=11 // pred_fallthru
        _
      // Predicated region
      $region21: #{tpu_custom_call.1} parent=11 // pred_check
        %p146 = pneg %p99
      $region22: #{tpu_custom_call.1} parent=11 // pred_check_branch
        %148 = sbr.rel (%p146) target = $region24
      $region23: #{tpu_custom_call.1} parent=11 // pred_region
        _
      $region24: #{tpu_custom_call.1} parent=11 // pred_fallthru
        _
    $region12: #{tpu_custom_call.1} parent=5 // pred_fallthru
      _
    %p149 = scmp.lt.s32.totalorder %s10, 2
    // Predicated region
    $region25: #{tpu_custom_call.1} parent=5 // pred_check
      %p150 = pneg %p149
    $region26: #{tpu_custom_call.1} parent=5 // pred_check_branch
      %152 = sbr.rel (%p150) target = $region28
    $region27: #{tpu_custom_call.1} parent=5 // pred_region
      // Predicated region
      $region29: #{tpu_custom_call.1} parent=27 // pred_check
        %p153 = pneg %p30
      $region30: #{tpu_custom_call.1} parent=27 // pred_check_branch
        %155 = sbr.rel (%p153) target = $region32
      $region31: #{tpu_custom_call.1} parent=27 // pred_region
        %s156 = smul.u32 8, %s10
        %p157 = scmp.lt.s32.totalorder %s156, 15
        %s158 = scalar_select %p157, %s156, 15
        %s159 = smul.addr %s158, 4
        %s160 = smul.addr %s159, 8
        %s161 = scalar_lea.vmem %s0, %s160
        %s162 = smul.u32 8, %s10
      $region32: #{tpu_custom_call.1} parent=27 // pred_fallthru
        _
    $region28: #{tpu_custom_call.1} parent=5 // pred_fallthru
      _
    %p163 = scmp.le.s32.totalorder 1, %s10
    %p164 = scmp.lt.s32.totalorder %s10, 3
    %p165 = pnand %p163, %p164
    %p166 = pneg %p165
    // Predicated region
    $region33: #{tpu_custom_call.1} parent=5 // pred_check
      _
    $region34: #{tpu_custom_call.1} parent=5 // pred_check_branch
      %168 = sbr.rel (%p165) target = $region36
    $region35: #{tpu_custom_call.1} parent=5 // pred_region
      %s169 = ssub.s32 %s10, 1
      %s170 = smul.u32 8, %s15
      %p171 = scmp.lt.s32.totalorder %s170, 15
      %s172 = scalar_select %p171, %s170, 15
      %s173 = smul.addr %s172, 4
      %s174 = smul.addr %s173, 8
      %s175 = scalar_lea.vmem %s0, %s174
      %p176 = pneg %p36
      %p177 = pneg %p33
      %p178 = pneg %p57
      %p179 = pneg %p54
      %p180 = pneg %p78
      %p181 = pneg %p75
      %p182 = pneg %p99
      %p183 = pneg %p96
      %p184 = pneg %p125
      %p185 = pneg %p122
      %s186 = smul.u32 8, %s15
      %p187 = scmp.lt.s32.totalorder %s186, 15
      %s188 = scalar_select %p187, %s186, 15
      %s189 = smul.addr %s188, 8
      %s190 = scalar_lea.vmem %s4, %s189
      %s191 = smul.u32 8, %s15
      %p192 = scmp.lt.s32.totalorder %s191, 15
      %s193 = scalar_select %p192, %s191, 15
      %s194 = smul.addr %s193, 4
      %s195 = smul.addr %s194, 8
      %s196 = scalar_lea.vmem %s0, %s195
      %s197 = smul.u32 8, %s15
      %s198 = smul.u32 8, %s15
      %p199 = scmp.lt.s32.totalorder %s198, 15
      %s200 = scalar_select %p199, %s198, 15
      %s201 = smul.addr %s200, 8
      %s202 = scalar_lea.vmem %s4, %s201
      %s203 = smul.u32 8, %s15
      %v204 = vld [vmem:[%s196] sm:$0xff]
      %v205 = vld [vmem:[%s196 + $0x8] sm:$0xff]
      %v206 = vld [vmem:[%s196 + $0x10] sm:$0xff]
      %v207 = vld [vmem:[%s196 + $0x18] sm:$0xff]
      %v208 = vld [vmem:[%s196 + $0x20] sm:$0xff]
      %v209 = vld [vmem:[%s196 + $0x28] sm:$0xff]
      %v210 = vld [vmem:[%s196 + $0x30] sm:$0xff]
      %v211 = vld [vmem:[%s196 + $0x38] sm:$0xff]
      %v212 = vld [vmem:[%s196 + $0x40] sm:$0xff]
      %v213 = vld [vmem:[%s196 + $0x48] sm:$0xff]
      %v214 = vld [vmem:[%s196 + $0x50] sm:$0xff]
      %v215 = vld [vmem:[%s196 + $0x58] sm:$0xff]
      %v216 = vld [vmem:[%s196 + $0x60] sm:$0xff]
      %v217 = vld [vmem:[%s196 + $0x68] sm:$0xff]
      %v218 = vld [vmem:[%s196 + $0x70] sm:$0xff]
      %v219 = vld [vmem:[%s196 + $0x78] sm:$0xff]
      %v220 = vld [vmem:[%s196 + $0x80] sm:$0xff]
      %v221 = vld [vmem:[%s196 + $0x88] sm:$0xff]
      %v222 = vld [vmem:[%s196 + $0x90] sm:$0xff]
      %v223 = vld [vmem:[%s196 + $0x98] sm:$0xff]
      %v224 = vld [vmem:[%s196 + $0xa0] sm:$0xff]
      %v225 = vld [vmem:[%s196 + $0xa8] sm:$0xff]
      %v226 = vld [vmem:[%s196 + $0xb0] sm:$0xff]
      %v227 = vld [vmem:[%s196 + $0xb8] sm:$0xff]
      %v228 = vld [vmem:[%s196 + $0xc0] sm:$0xff]
      %v229 = vld [vmem:[%s196 + $0xc8] sm:$0xff]
      %v230 = vld [vmem:[%s196 + $0xd0] sm:$0xff]
      %v231 = vld [vmem:[%s196 + $0xd8] sm:$0xff]
      %v232 = vld [vmem:[%s196 + $0xe0] sm:$0xff]
      %v233 = vld [vmem:[%s196 + $0xe8] sm:$0xff]
      %v234 = vld [vmem:[%s196 + $0xf0] sm:$0xff]
      %v235 = vld [vmem:[%s196 + $0xf8] sm:$0xff]
      %v236 = vld [vmem:[%s1] sm:$0xf]
      %vm237 = vcmask 31744
      %v239 = vsel %vm237, %v204, 0
      %v242 = vsel %vm237, %v205, 0
      %v245 = vsel %vm237, %v206, 0
      %v248 = vsel %vm237, %v207, 0
      %v251 = vsel %vm237, %v208, 0
      %v254 = vsel %vm237, %v209, 0
      %v257 = vsel %vm237, %v210, 0
      %v260 = vsel %vm237, %v211, 0
      %v263 = vsel %vm237, %v212, 0
      %v266 = vsel %vm237, %v213, 0
      %v269 = vsel %vm237, %v214, 0
      %v272 = vsel %vm237, %v215, 0
      %v275 = vsel %vm237, %v216, 0
      %v278 = vsel %vm237, %v217, 0
      %v281 = vsel %vm237, %v218, 0
      %v284 = vsel %vm237, %v219, 0
      %v287 = vsel %vm237, %v220, 0
      %v290 = vsel %vm237, %v221, 0
      %v293 = vsel %vm237, %v222, 0
      %v296 = vsel %vm237, %v223, 0
      %v299 = vsel %vm237, %v224, 0
      %v302 = vsel %vm237, %v225, 0
      %v305 = vsel %vm237, %v226, 0
      %v308 = vsel %vm237, %v227, 0
      %v311 = vsel %vm237, %v228, 0
      %v314 = vsel %vm237, %v229, 0
      %v317 = vsel %vm237, %v230, 0
      %v320 = vsel %vm237, %v231, 0
      %v323 = vsel %vm237, %v232, 0
      %v326 = vsel %vm237, %v233, 0
      %v329 = vsel %vm237, %v234, 0
      %v332 = vsel %vm237, %v235, 0
      %vm334 = vcmask 1043456
      %v336 = vsel %vm334, %v236, 0
      %338 = vmatpush.msra.mxu0 0.0
      %339 = vmatpush.msra.mxu0 0.0
      %340 = vmatpush.msra.mxu0 0.0
      %341 = vmatpush.msra.mxu0 0.0
      %342 = vmatpush.msra.mxu0 0.0
      %343 = vmatpush.msra.mxu0 0.0
      %344 = vmatpush.msra.mxu0 0.0
      %345 = vmatpush.msra.mxu0 0.0
      %346 = vmatpush.msra.mxu0 0.0
      %347 = vmatpush.msra.mxu0 0.0
      %348 = vmatpush.msra.mxu0 0.0
      %349 = vmatpush.msra.mxu0 0.0
      %350 = vmatpush.msra.mxu0 0.0
      %351 = vmatpush.msra.mxu0 0.0
      %352 = vmatpush.msra.mxu0 0.0
      %353 = vmatpush.msra.mxu0 %v336
      %354 = vmatmul.f32.gmra.mxu0 %v239
      %v355 = vpop.f32.mrf.mxu0
      %v356 = vadd.f32 0.0, %v355
      %357 = vmatmul.f32.gmra.mxu0 %v242
      %v358 = vpop.f32.mrf.mxu0
      %v359 = vadd.f32 0.0, %v358
      %360 = vmatmul.f32.gmra.mxu0 %v245
      %v361 = vpop.f32.mrf.mxu0
      %v362 = vadd.f32 0.0, %v361
      %363 = vmatmul.f32.gmra.mxu0 %v248
      %v364 = vpop.f32.mrf.mxu0
      %v365 = vadd.f32 0.0, %v364
      %366 = vmatmul.f32.gmra.mxu0 %v251
      %v367 = vpop.f32.mrf.mxu0
      %v368 = vadd.f32 0.0, %v367
      %369 = vmatmul.f32.gmra.mxu0 %v254
      %v370 = vpop.f32.mrf.mxu0
      %v371 = vadd.f32 0.0, %v370
      %372 = vmatmul.f32.gmra.mxu0 %v257
      %v373 = vpop.f32.mrf.mxu0
      %v374 = vadd.f32 0.0, %v373
      %375 = vmatmul.f32.gmra.mxu0 %v260
      %v376 = vpop.f32.mrf.mxu0
      %v377 = vadd.f32 0.0, %v376
      %378 = vmatmul.f32.gmra.mxu0 %v263
      %v379 = vpop.f32.mrf.mxu0
      %v380 = vadd.f32 0.0, %v379
      %381 = vmatmul.f32.gmra.mxu0 %v266
      %v382 = vpop.f32.mrf.mxu0
      %v383 = vadd.f32 0.0, %v382
      %384 = vmatmul.f32.gmra.mxu0 %v269
      %v385 = vpop.f32.mrf.mxu0
      %v386 = vadd.f32 0.0, %v385
      %387 = vmatmul.f32.gmra.mxu0 %v272
      %v388 = vpop.f32.mrf.mxu0
      %v389 = vadd.f32 0.0, %v388
      %390 = vmatmul.f32.gmra.mxu0 %v275
      %v391 = vpop.f32.mrf.mxu0
      %v392 = vadd.f32 0.0, %v391
      %393 = vmatmul.f32.gmra.mxu0 %v278
      %v394 = vpop.f32.mrf.mxu0
      %v395 = vadd.f32 0.0, %v394
      %396 = vmatmul.f32.gmra.mxu0 %v281
      %v397 = vpop.f32.mrf.mxu0
      %v398 = vadd.f32 0.0, %v397
      %399 = vmatmul.f32.gmra.mxu0 %v284
      %v400 = vpop.f32.mrf.mxu0
      %v401 = vadd.f32 0.0, %v400
      %402 = vmatmul.f32.gmra.mxu0 %v287
      %v403 = vpop.f32.mrf.mxu0
      %v404 = vadd.f32 0.0, %v403
      %405 = vmatmul.f32.gmra.mxu0 %v290
      %v406 = vpop.f32.mrf.mxu0
      %v407 = vadd.f32 0.0, %v406
      %408 = vmatmul.f32.gmra.mxu0 %v293
      %v409 = vpop.f32.mrf.mxu0
      %v410 = vadd.f32 0.0, %v409
      %411 = vmatmul.f32.gmra.mxu0 %v296
      %v412 = vpop.f32.mrf.mxu0
      %v413 = vadd.f32 0.0, %v412
      %414 = vmatmul.f32.gmra.mxu0 %v299
      %v415 = vpop.f32.mrf.mxu0
      %v416 = vadd.f32 0.0, %v415
      %417 = vmatmul.f32.gmra.mxu0 %v302
      %v418 = vpop.f32.mrf.mxu0
      %v419 = vadd.f32 0.0, %v418
      %420 = vmatmul.f32.gmra.mxu0 %v305
      %v421 = vpop.f32.mrf.mxu0
      %v422 = vadd.f32 0.0, %v421
      %423 = vmatmul.f32.gmra.mxu0 %v308
      %v424 = vpop.f32.mrf.mxu0
      %v425 = vadd.f32 0.0, %v424
      %426 = vmatmul.f32.gmra.mxu0 %v311
      %v427 = vpop.f32.mrf.mxu0
      %v428 = vadd.f32 0.0, %v427
      %429 = vmatmul.f32.gmra.mxu0 %v314
      %v430 = vpop.f32.mrf.mxu0
      %v431 = vadd.f32 0.0, %v430
      %432 = vmatmul.f32.gmra.mxu0 %v317
      %v433 = vpop.f32.mrf.mxu0
      %v434 = vadd.f32 0.0, %v433
      %435 = vmatmul.f32.gmra.mxu0 %v320
      %v436 = vpop.f32.mrf.mxu0
      %v437 = vadd.f32 0.0, %v436
      %438 = vmatmul.f32.gmra.mxu0 %v323
      %v439 = vpop.f32.mrf.mxu0
      %v440 = vadd.f32 0.0, %v439
      %441 = vmatmul.f32.gmra.mxu0 %v326
      %v442 = vpop.f32.mrf.mxu0
      %v443 = vadd.f32 0.0, %v442
      %444 = vmatmul.f32.gmra.mxu0 %v329
      %v445 = vpop.f32.mrf.mxu0
      %v446 = vadd.f32 0.0, %v445
      %447 = vmatmul.f32.gmra.mxu0 %v332
      %v448 = vpop.f32.mrf.mxu0
      %v449 = vadd.f32 0.0, %v448
      %450 = vdwg.mxu0
      %v451 = vld [vmem:[%s2] sm:$0x1]
      %v453 = vperm.slane %v451, 0
      %v455 = vmul.f32 %v356, %v453
      %v456 = vmul.f32 %v359, %v453
      %v457 = vmul.f32 %v362, %v453
      %v458 = vmul.f32 %v365, %v453
      %v459 = vmul.f32 %v368, %v453
      %v460 = vmul.f32 %v371, %v453
      %v461 = vmul.f32 %v374, %v453
      %v462 = vmul.f32 %v377, %v453
      %v463 = vmul.f32 %v380, %v453
      %v464 = vmul.f32 %v383, %v453
      %v465 = vmul.f32 %v386, %v453
      %v466 = vmul.f32 %v389, %v453
      %v467 = vmul.f32 %v392, %v453
      %v468 = vmul.f32 %v395, %v453
      %v469 = vmul.f32 %v398, %v453
      %v470 = vmul.f32 %v401, %v453
      %v471 = vmul.f32 %v404, %v453
      %v472 = vmul.f32 %v407, %v453
      %v473 = vmul.f32 %v410, %v453
      %v474 = vmul.f32 %v413, %v453
      %v475 = vmul.f32 %v416, %v453
      %v476 = vmul.f32 %v419, %v453
      %v477 = vmul.f32 %v422, %v453
      %v478 = vmul.f32 %v425, %v453
      %v479 = vmul.f32 %v428, %v453
      %v480 = vmul.f32 %v431, %v453
      %v481 = vmul.f32 %v434, %v453
      %v482 = vmul.f32 %v437, %v453
      %v483 = vmul.f32 %v440, %v453
      %v484 = vmul.f32 %v443, %v453
      %v485 = vmul.f32 %v446, %v453
      %v486 = vmul.f32 %v449, %v453
      %v487 = vld [vmem:[%s3] sm:$0x1]
      %v489 = vperm.slane %v487, 0
      %v491 = vadd.f32 %v455, %v489
      %v492 = vadd.f32 %v456, %v489
      %v493 = vadd.f32 %v457, %v489
      %v494 = vadd.f32 %v458, %v489
      %v495 = vadd.f32 %v459, %v489
      %v496 = vadd.f32 %v460, %v489
      %v497 = vadd.f32 %v461, %v489
      %v498 = vadd.f32 %v462, %v489
      %v499 = vadd.f32 %v463, %v489
      %v500 = vadd.f32 %v464, %v489
      %v501 = vadd.f32 %v465, %v489
      %v502 = vadd.f32 %v466, %v489
      %v503 = vadd.f32 %v467, %v489
      %v504 = vadd.f32 %v468, %v489
      %v505 = vadd.f32 %v469, %v489
      %v506 = vadd.f32 %v470, %v489
      %v507 = vadd.f32 %v471, %v489
      %v508 = vadd.f32 %v472, %v489
      %v509 = vadd.f32 %v473, %v489
      %v510 = vadd.f32 %v474, %v489
      %v511 = vadd.f32 %v475, %v489
      %v512 = vadd.f32 %v476, %v489
      %v513 = vadd.f32 %v477, %v489
      %v514 = vadd.f32 %v478, %v489
      %v515 = vadd.f32 %v479, %v489
      %v516 = vadd.f32 %v480, %v489
      %v517 = vadd.f32 %v481, %v489
      %v518 = vadd.f32 %v482, %v489
      %v519 = vadd.f32 %v483, %v489
      %v520 = vadd.f32 %v484, %v489
      %v521 = vadd.f32 %v485, %v489
      %v522 = vadd.f32 %v486, %v489
      %v523 = vmax.f32 %v491, 0.0
      %v524 = vmax.f32 %v492, 0.0
      %v525 = vmax.f32 %v493, 0.0
      %v526 = vmax.f32 %v494, 0.0
      %v527 = vmax.f32 %v495, 0.0
      %v528 = vmax.f32 %v496, 0.0
      %v529 = vmax.f32 %v497, 0.0
      %v530 = vmax.f32 %v498, 0.0
      %v531 = vmax.f32 %v499, 0.0
      %v532 = vmax.f32 %v500, 0.0
      %v533 = vmax.f32 %v501, 0.0
      %v534 = vmax.f32 %v502, 0.0
      %v535 = vmax.f32 %v503, 0.0
      %v536 = vmax.f32 %v504, 0.0
      %v537 = vmax.f32 %v505, 0.0
      %v538 = vmax.f32 %v506, 0.0
      %v539 = vmax.f32 %v507, 0.0
      %v540 = vmax.f32 %v508, 0.0
      %v541 = vmax.f32 %v509, 0.0
      %v542 = vmax.f32 %v510, 0.0
      %v543 = vmax.f32 %v511, 0.0
      %v544 = vmax.f32 %v512, 0.0
      %v545 = vmax.f32 %v513, 0.0
      %v546 = vmax.f32 %v514, 0.0
      %v547 = vmax.f32 %v515, 0.0
      %v548 = vmax.f32 %v516, 0.0
      %v549 = vmax.f32 %v517, 0.0
      %v550 = vmax.f32 %v518, 0.0
      %v551 = vmax.f32 %v519, 0.0
      %v552 = vmax.f32 %v520, 0.0
      %v553 = vmax.f32 %v521, 0.0
      %v554 = vmax.f32 %v522, 0.0
      %v555 = vadd.f32 %v523, %v524
      %v556 = vadd.f32 %v527, %v528
      %v557 = vadd.f32 %v531, %v532
      %v558 = vadd.f32 %v535, %v536
      %v559 = vadd.f32 %v539, %v540
      %v560 = vadd.f32 %v543, %v544
      %v561 = vadd.f32 %v547, %v548
      %v562 = vadd.f32 %v551, %v552
      %v563 = vadd.f32 %v555, %v525
      %v564 = vadd.f32 %v556, %v529
      %v565 = vadd.f32 %v557, %v533
      %v566 = vadd.f32 %v558, %v537
      %v567 = vadd.f32 %v559, %v541
      %v568 = vadd.f32 %v560, %v545
      %v569 = vadd.f32 %v561, %v549
      %v570 = vadd.f32 %v562, %v553
      %v571 = vadd.f32 %v563, %v526
      %v572 = vadd.f32 %v564, %v530
      %v573 = vadd.f32 %v565, %v534
      %v574 = vadd.f32 %v566, %v538
      %v575 = vadd.f32 %v567, %v542
      %v576 = vadd.f32 %v568, %v546
      %v577 = vadd.f32 %v569, %v550
      %v578 = vadd.f32 %v570, %v554
      %v579 = vmul.f32 %v571, 0.25
      %v580 = vmul.f32 %v572, 0.25
      %v581 = vmul.f32 %v573, 0.25
      %v582 = vmul.f32 %v574, 0.25
      %v583 = vmul.f32 %v575, 0.25
      %v584 = vmul.f32 %v576, 0.25
      %v585 = vmul.f32 %v577, 0.25
      %v586 = vmul.f32 %v578, 0.25
      %587 = vst.msk [vmem:[%s202] sm:$0xff] %vm237, %v579
      %588 = vst.msk [vmem:[%s202 + $0x8] sm:$0xff] %vm237, %v580
      %589 = vst.msk [vmem:[%s202 + $0x10] sm:$0xff] %vm237, %v581
      %590 = vst.msk [vmem:[%s202 + $0x18] sm:$0xff] %vm237, %v582
      %591 = vst.msk [vmem:[%s202 + $0x20] sm:$0xff] %vm237, %v583
      %592 = vst.msk [vmem:[%s202 + $0x28] sm:$0xff] %vm237, %v584
      %593 = vst.msk [vmem:[%s202 + $0x30] sm:$0xff] %vm237, %v585
      %594 = vst.msk [vmem:[%s202 + $0x38] sm:$0xff] %vm237, %v586
      %s595 = smul.u32 8, %s15
      %p596 = scmp.lt.s32.totalorder %s595, 15
      %s597 = scalar_select %p596, %s595, 15
      %s598 = smul.addr %s597, 8
      %s599 = scalar_lea.vmem %s4, %s598
      // Predicated region
      $region37: #{tpu_custom_call.1} parent=35 // pred_check
        %p600 = pneg %p122
      $region38: #{tpu_custom_call.1} parent=35 // pred_check_branch
        %602 = sbr.rel (%p600) target = $region40
      $region39: #{tpu_custom_call.1} parent=35 // pred_region
        %s603 = smul.u32 8, %s15
      $region40: #{tpu_custom_call.1} parent=35 // pred_fallthru
        _
    $region36: #{tpu_custom_call.1} parent=5 // pred_fallthru
      _
    %p604 = scmp.le.s32.totalorder 2, %s10
    // Predicated region
    $region41: #{tpu_custom_call.1} parent=5 // pred_check
      %p605 = pneg %p604
    $region42: #{tpu_custom_call.1} parent=5 // pred_check_branch
      %607 = sbr.rel (%p605) target = $region44
    $region43: #{tpu_custom_call.1} parent=5 // pred_region
      %s608 = ssub.s32 %s10, 2
      // Predicated region
      $region45: #{tpu_custom_call.1} parent=43 // pred_check
        %p609 = pneg %p128
      $region46: #{tpu_custom_call.1} parent=43 // pred_check_branch
        %611 = sbr.rel (%p609) target = $region48
      $region47: #{tpu_custom_call.1} parent=43 // pred_region
        %s612 = smul.u32 8, %s16
        %p613 = scmp.lt.s32.totalorder %s612, 15
        %s614 = scalar_select %p613, %s612, 15
        %s615 = smul.addr %s614, 8
        %s616 = scalar_lea.vmem %s4, %s615
      $region48: #{tpu_custom_call.1} parent=43 // pred_fallthru
        _
    $region44: #{tpu_custom_call.1} parent=5 // pred_fallthru
      _
  $region6: #{tpu_custom_call.1} parent=0 // loop_footer
    %s14 = sadd.s32 1, %s10
  $region7: #{tpu_custom_call.1} parent=0 // loop_footer_branch
    %9 = sbr.rel target = $region3
  $region8: #{tpu_custom_call.1} parent=0 // loop_exit
    _

</llo_original>
